<compile_context>
chip_gen: v7x
topology: tpu7x:2x2x1
jax: 0.10.0
libtpu: 0.0.40
codegen_flags: <defaults>
</compile_context>

<pallas_src>
import functools

import jax
import jax.numpy as jnp
from jax.experimental import pallas as pl
from jax.experimental.pallas import tpu as pltpu

IN_DIM = 101      # 100 seed + 1 label
HID = 200
OUT = 784
PAD_IN = 128      # 101 -> one full lane tile
PAD_HID = 256     # 200 -> 2 x 128 lanes
PAD_B = 8         # single sample padded to the sublane count
LN_EPS = 1e-5
LEAK = 0.02


def _generator_kernel(x_ref, w1_ref, b1_ref, w2_ref, b2_ref, o_ref):
    # x: (TB, PAD_IN) bf16.  Padded input lanes hit zero w1 rows; padded batch
    # rows are discarded by the wrapper, so padding is inert.
    x = x_ref[...]

    # Linear(101 -> 200) padded to (128 -> 256).  bf16 MXU operands, f32 acc.
    h = jnp.dot(x, w1_ref[...], preferred_element_type=jnp.float32) + b1_ref[...]

    # LeakyReLU(0.02) as a single vmax (valid because 0 < LEAK < 1).
    # Padded lanes stay exactly 0.
    h = jnp.maximum(h, LEAK * h)

    # LayerNorm over the true 200 features (biased variance, torch semantics).
    # Padded lanes of h are exactly 0, so sum(h) and sum(h*h) need no mask.
    inv_n = 1.0 / HID
    mean = jnp.sum(h, axis=-1, keepdims=True) * inv_n
    ex2 = jnp.sum(h * h, axis=-1, keepdims=True) * inv_n
    var = ex2 - mean * mean
    hn = (h - mean) * jax.lax.rsqrt(var + LN_EPS)
    # Padded lanes of hn become -mean*inv_std, but they hit zero rows of w2.

    # Linear(200 -> 784) with the LN affine folded into w2/b2 at prepare time.
    # bf16 MXU operands, f32 accumulate; output stays at its true 784 width.
    y = jnp.dot(hn.astype(jnp.bfloat16), w2_ref[...],
                preferred_element_type=jnp.float32) + b2_ref[...]

    # Sigmoid via a single EUP tanh: sigmoid(y) = 0.5 * tanh(y/2) + 0.5.
    o_ref[...] = 0.5 * jnp.tanh(0.5 * y) + 0.5


def prepare_params(params, weights_dtype=jnp.bfloat16):
    """One-time padding / LN-affine folding / bf16 conversion of parameters."""
    w1, b1, gamma, beta, w2, b2 = params
    # Fold LayerNorm affine into the second linear (done in f32, then cast).
    w2f = gamma[:, None] * w2                 # (200, 784)
    b2f = beta @ w2 + b2                      # (784,)
    w1p = jnp.zeros((PAD_IN, PAD_HID), weights_dtype).at[:IN_DIM, :HID].set(
        w1.astype(weights_dtype))
    w2p = jnp.zeros((PAD_HID, OUT), weights_dtype).at[:HID, :].set(
        w2f.astype(weights_dtype))
    b1p = jnp.zeros((1, PAD_HID), jnp.float32).at[0, :HID].set(b1)
    b2p = b2f.reshape(1, OUT).astype(jnp.float32)
    return tuple(jax.device_put(a) for a in (w1p, b1p, w2p, b2p))


@jax.jit
def mnist_conditional_generator(seed_tensor, label_tensor, prepared):
    """Single-sample forward: seed (100,), label (1,) -> (784,)."""
    w1p, b1p, w2p, b2p = prepared
    # torch.cat((seed, label)) -> (101,), padded to one (8, 128) bf16 tile.
    x = jnp.concatenate([seed_tensor, label_tensor], axis=0)
    x_pad = jnp.zeros((PAD_B, PAD_IN), jnp.bfloat16).at[0, :IN_DIM].set(
        x.astype(jnp.bfloat16))

    out = pl.pallas_call(
        _generator_kernel,
        out_shape=jax.ShapeDtypeStruct((PAD_B, OUT), jnp.float32),
    )(x_pad, w1p, b1p, w2p, b2p)
    return out[0]


def _pick_tm(batch, tm_max=512):
    """Largest 128-multiple tile <= tm_max, keeping >= 2 grid tiles when
    B > 128 so both v7x TensorCores receive work."""
    if batch <= 128:
        return 128
    half = -(-batch // 2)                       # cdiv(B, 2)
    tm = ((half + 127) // 128) * 128            # round up to 128
    return max(128, min(tm_max, tm))


@functools.partial(jax.jit, static_argnames=("tm",))
def _batched_impl(seeds, labels, prepared, tm):
    w1p, b1p, w2p, b2p = prepared
    B = seeds.shape[0]
    x = jnp.concatenate([seeds, labels], axis=1)            # (B, 101)
    nb = pl.cdiv(B, tm)
    rows = nb * tm
    x_pad = jnp.zeros((rows, PAD_IN), jnp.bfloat16).at[:B, :IN_DIM].set(
        x.astype(jnp.bfloat16))

    grid_spec = pltpu.PrefetchScalarGridSpec(
        num_scalar_prefetch=0,
        grid=(nb,),
        in_specs=[
            pl.BlockSpec((tm, PAD_IN), lambda i: (i, 0)),        # x tiles
            pl.BlockSpec((PAD_IN, PAD_HID), lambda i: (0, 0)),   # w1 (resident)
            pl.BlockSpec((1, PAD_HID), lambda i: (0, 0)),        # b1
            pl.BlockSpec((PAD_HID, OUT), lambda i: (0, 0)),      # w2 (resident)
            pl.BlockSpec((1, OUT), lambda i: (0, 0)),            # b2
        ],
        out_specs=pl.BlockSpec((tm, OUT), lambda i: (i, 0)),
    )
    out = pl.pallas_call(
        _generator_kernel,
        out_shape=jax.ShapeDtypeStruct((rows, OUT), jnp.float32),
        grid_spec=grid_spec,
        compiler_params=pltpu.CompilerParams(
            dimension_semantics=("parallel",)),   # v7x: shard batch tiles over TCs
    )(x_pad, w1p, b1p, w2p, b2p)
    return out if rows == B else out[:B]


def mnist_conditional_generator_batched(seeds, labels, prepared, tm_max=512):
    """Batched forward: seeds (B,100), labels (B,1) -> (B,784)."""
    return _batched_impl(seeds, labels, prepared, _pick_tm(seeds.shape[0], tm_max))


def init_params(key):
    """Deterministic synthetic parameters with the module's shapes."""
    k1, k2, k3, k4 = jax.random.split(key, 4)
    # Linear(101, 200): stored as (in, out); equivalent to x @ W.T + b.
    w1 = jax.random.uniform(k1, (IN_DIM, HID), jnp.float32,
                            minval=-1.0, maxval=1.0) / jnp.sqrt(IN_DIM)
    b1 = jax.random.uniform(k2, (HID,), jnp.float32,
                            minval=-1.0, maxval=1.0) / jnp.sqrt(IN_DIM)
    # LayerNorm(200) default affine init.
    gamma = jnp.ones((HID,), jnp.float32)
    beta = jnp.zeros((HID,), jnp.float32)
    # Linear(200, 784)
    w2 = jax.random.uniform(k3, (HID, OUT), jnp.float32,
                            minval=-1.0, maxval=1.0) / jnp.sqrt(HID)
    b2 = jax.random.uniform(k4, (OUT,), jnp.float32,
                            minval=-1.0, maxval=1.0) / jnp.sqrt(HID)
    return (w1, b1, gamma, beta, w2, b2)


def _reference(x, params):
    """Pure-f32 reference of the torch forward (x already concatenated)."""
    w1, b1, gamma, beta, w2, b2 = params
    h = x @ w1 + b1
    h = jnp.where(h >= 0.0, h, LEAK * h)
    mean = jnp.mean(h, axis=-1, keepdims=True)
    var = jnp.mean((h - mean) ** 2, axis=-1, keepdims=True)
    hn = (h - mean) / jnp.sqrt(var + LN_EPS) * gamma + beta
    return jax.nn.sigmoid(hn @ w2 + b2)


def _reference_mirror(x, params):
    """Mirror of the kernel's numerics (bf16 weights, folded LN affine,
    E[x^2]-mean^2 variance), with f32 activations."""
    w1, b1, gamma, beta, w2, b2 = params
    w1r = w1.astype(jnp.bfloat16).astype(jnp.float32)
    w2r = (gamma[:, None] * w2).astype(jnp.bfloat16).astype(jnp.float32)
    b2r = beta @ w2 + b2
    h = x @ w1r + b1
    h = jnp.maximum(h, LEAK * h)
    mean = jnp.mean(h, axis=-1, keepdims=True)
    var = jnp.mean(h * h, axis=-1, keepdims=True) - mean * mean
    hn = (h - mean) * jax.lax.rsqrt(var + LN_EPS)
    return jax.nn.sigmoid(hn @ w2r + b2r)


if __name__ == "__main__":
    key = jax.random.PRNGKey(0)
    kp, ks, kl, kbs, kbl = jax.random.split(key, 5)

    params = init_params(kp)
    prepared = prepare_params(params)          # one-time pad + fold + bf16 cast

    # --- single-sample forward (matches module.forward(seed, label)) -------
    seed_tensor = jax.random.normal(ks, (100,), jnp.float32)
    label_tensor = jax.random.uniform(kl, (1,), jnp.float32)
    out = jax.block_until_ready(
        mnist_conditional_generator(seed_tensor, label_tensor, prepared))
    assert out.shape == (OUT,)
    x1 = jnp.concatenate([seed_tensor, label_tensor], axis=0)
    ref_m = _reference_mirror(x1, params)
    ref_f = _reference(x1, params)
    assert jnp.allclose(out, ref_m, atol=1e-2, rtol=1e-2)   # same-weight parity
    assert jnp.allclose(out, ref_f, atol=3e-2, rtol=3e-2)   # bf16-weight effect

    # --- batched throughput path (grid over batch tiles, 2 tiles here) ------
    B = 130
    seeds = jax.random.normal(kbs, (B, 100), jnp.float32)
    labels = jax.random.uniform(kbl, (B, 1), jnp.float32)
    outs = jax.block_until_ready(
        mnist_conditional_generator_batched(seeds, labels, prepared))
    assert outs.shape == (B, OUT)
    xb = jnp.concatenate([seeds, labels], axis=1)
    refs_m = _reference_mirror(xb, params)
    refs_f = _reference(xb, params)
    assert jnp.allclose(outs, refs_m, atol=1e-2, rtol=1e-2)
    assert jnp.allclose(outs, refs_f, atol=3e-2, rtol=3e-2)

    print("KERNEL_OK")
</pallas_src>

<mosaic_0001>
module attributes {stable_mosaic.version = 11 : i64} {
  func.func @_generator_kernel(%arg0: memref<8x128xbf16, #tpu.memory_space<vmem>>, %arg1: memref<128x256xbf16, #tpu.memory_space<vmem>>, %arg2: memref<1x256xf32, #tpu.memory_space<vmem>>, %arg3: memref<256x784xbf16, #tpu.memory_space<vmem>>, %arg4: memref<1x784xf32, #tpu.memory_space<vmem>>, %arg5: memref<8x784xf32, #tpu.memory_space<vmem>>) attributes {dimension_semantics = [], scalar_prefetch = 0 : i64, scratch_operands = 0 : i64, tpu.core_type = #tpu.core_type<tc>} {
    %c0 = arith.constant 0 : index
    %c0_0 = arith.constant 0 : index
    %0 = vector.load %arg0[%c0, %c0_0] : memref<8x128xbf16, #tpu.memory_space<vmem>>, vector<8x128xbf16>
    %c0_1 = arith.constant 0 : index
    %c0_2 = arith.constant 0 : index
    %1 = vector.load %arg1[%c0_1, %c0_2] : memref<128x256xbf16, #tpu.memory_space<vmem>>, vector<128x256xbf16>
    %cst = arith.constant dense<0.000000e+00> : vector<8x256xf32>
    %2 = tpu.matmul %0, %1, %cst {dimension_numbers = #tpu.dot_dimension_numbers<[1], [0], [0], [1], [0, 0, 1, 1], [], []>} : vector<8x128xbf16>, vector<128x256xbf16>, vector<8x256xf32> -> vector<8x256xf32>
    %c0_3 = arith.constant 0 : index
    %c0_4 = arith.constant 0 : index
    %3 = vector.load %arg2[%c0_3, %c0_4] : memref<1x256xf32, #tpu.memory_space<vmem>>, vector<1x256xf32>
    %4 = vector.broadcast %3 : vector<1x256xf32> to vector<8x256xf32>
    %5 = arith.addf %2, %4 : vector<8x256xf32>
    %cst_5 = arith.constant 2.000000e-02 : f32
    %6 = vector.broadcast %cst_5 : f32 to vector<8x256xf32>
    %7 = arith.mulf %6, %5 : vector<8x256xf32>
    %8 = arith.maximumf %5, %7 : vector<8x256xf32>
    %cst_6 = arith.constant dense<0.000000e+00> : vector<8xf32>
    %9 = vector.multi_reduction <add>, %8, %cst_6 [1] : vector<8x256xf32> to vector<8xf32>
    %10 = vector.shape_cast %9 : vector<8xf32> to vector<8x1xf32>
    %cst_7 = arith.constant 5.000000e-03 : f32
    %11 = vector.broadcast %cst_7 : f32 to vector<8x1xf32>
    %12 = arith.mulf %10, %11 : vector<8x1xf32>
    %13 = arith.mulf %8, %8 : vector<8x256xf32>
    %cst_8 = arith.constant dense<0.000000e+00> : vector<8xf32>
    %14 = vector.multi_reduction <add>, %13, %cst_8 [1] : vector<8x256xf32> to vector<8xf32>
    %15 = vector.shape_cast %14 : vector<8xf32> to vector<8x1xf32>
    %cst_9 = arith.constant 5.000000e-03 : f32
    %16 = vector.broadcast %cst_9 : f32 to vector<8x1xf32>
    %17 = arith.mulf %15, %16 : vector<8x1xf32>
    %18 = arith.mulf %12, %12 : vector<8x1xf32>
    %19 = arith.subf %17, %18 : vector<8x1xf32>
    %20 = vector.broadcast %12 : vector<8x1xf32> to vector<8x256xf32>
    %21 = arith.subf %8, %20 : vector<8x256xf32>
    %cst_10 = arith.constant 9.99999974E-6 : f32
    %22 = vector.broadcast %cst_10 : f32 to vector<8x1xf32>
    %23 = arith.addf %19, %22 : vector<8x1xf32>
    %24 = math.rsqrt %23 : vector<8x1xf32>
    %25 = vector.broadcast %24 : vector<8x1xf32> to vector<8x256xf32>
    %26 = arith.mulf %21, %25 : vector<8x256xf32>
    %27 = arith.truncf %26 : vector<8x256xf32> to vector<8x256xbf16>
    %c0_11 = arith.constant 0 : index
    %c0_12 = arith.constant 0 : index
    %28 = vector.load %arg3[%c0_11, %c0_12] : memref<256x784xbf16, #tpu.memory_space<vmem>>, vector<256x784xbf16>
    %cst_13 = arith.constant dense<0.000000e+00> : vector<8x784xf32>
    %29 = tpu.matmul %27, %28, %cst_13 {dimension_numbers = #tpu.dot_dimension_numbers<[1], [0], [0], [1], [0, 0, 1, 1], [], []>} : vector<8x256xbf16>, vector<256x784xbf16>, vector<8x784xf32> -> vector<8x784xf32>
    %c0_14 = arith.constant 0 : index
    %c0_15 = arith.constant 0 : index
    %30 = vector.load %arg4[%c0_14, %c0_15] : memref<1x784xf32, #tpu.memory_space<vmem>>, vector<1x784xf32>
    %31 = vector.broadcast %30 : vector<1x784xf32> to vector<8x784xf32>
    %32 = arith.addf %29, %31 : vector<8x784xf32>
    %cst_16 = arith.constant 5.000000e-01 : f32
    %33 = vector.broadcast %cst_16 : f32 to vector<8x784xf32>
    %34 = arith.mulf %33, %32 : vector<8x784xf32>
    %35 = math.tanh %34 : vector<8x784xf32>
    %cst_17 = arith.constant 5.000000e-01 : f32
    %36 = vector.broadcast %cst_17 : f32 to vector<8x784xf32>
    %37 = arith.mulf %36, %35 : vector<8x784xf32>
    %cst_18 = arith.constant 5.000000e-01 : f32
    %38 = vector.broadcast %cst_18 : f32 to vector<8x784xf32>
    %39 = arith.addf %37, %38 : vector<8x784xf32>
    %c0_19 = arith.constant 0 : index
    %c0_20 = arith.constant 0 : index
    %40 = vector.load %arg5[%c0_19, %c0_20] : memref<8x784xf32, #tpu.memory_space<vmem>>, vector<8x784xf32>
    tpu.vector_store %arg5[%c0_19, %c0_20], %39 {strides = array<i32>} : memref<8x784xf32, #tpu.memory_space<vmem>>, vector<8x784xf32>,
    return
  }
}

</mosaic_0001>

<llo_original>
// kernel: mnist_conditional_generator.1
$region0: #{mnist_conditional_generator.1}
  #allocation0 [shape = 'u32[]', space=smem, size = 0x4, offset = 0x4, fixed_abs, tag = 'smem constant byte address 0x4 - core index']
  #allocation1 [shape = 'u32[144,128]{1,0:T(1,128)}', space=vmem, size = 0x12000, scoped, tag = 'internal scratch']
  %s0 = inlined_call_operand.vmem [shape: bf16[8,128], index: 0, kind: input, shape index: {}]
  %s1 = inlined_call_operand.vmem [shape: bf16[128,256], index: 1, kind: input, shape index: {}]
  %s2 = inlined_call_operand.vmem [shape: f32[1,256], index: 2, kind: input, shape index: {}]
  %s3 = inlined_call_operand.vmem [shape: bf16[256,784], index: 3, kind: input, shape index: {}]
  %s4 = inlined_call_operand.vmem [shape: f32[1,784], index: 4, kind: input, shape index: {}]
  %s5 = inlined_call_operand.vmem [shape: f32[8,784], index: 5, kind: output, shape index: {}]
  %s6 = sld [smem:[#allocation0]]
  $region30: #{mnist_conditional_generator.1} parent=0
    _
  %s8 = ssub.s32 1, %s6
  %s9 = scalar_select 0, %s8, %s6
  // Predicated region
  $region2: #{mnist_conditional_generator.1} parent=0 // pred_check
    _
  $region3: #{mnist_conditional_generator.1} parent=0 // pred_check_branch
    %11 = sbr.rel (0) target = $region5
  $region4: #{mnist_conditional_generator.1} parent=0 // pred_region
    _
  $region5: #{mnist_conditional_generator.1} parent=0 // pred_fallthru
    _
  // Predicated region
  $region6: #{mnist_conditional_generator.1} parent=0 // pred_check
    _
  $region7: #{mnist_conditional_generator.1} parent=0 // pred_check_branch
    %13 = sbr.rel (0) target = $region9
  $region8: #{mnist_conditional_generator.1} parent=0 // pred_region
    _
  $region9: #{mnist_conditional_generator.1} parent=0 // pred_fallthru
    _
  // Predicated region
  $region10: #{mnist_conditional_generator.1} parent=0 // pred_check
    _
  $region11: #{mnist_conditional_generator.1} parent=0 // pred_check_branch
    %15 = sbr.rel (0) target = $region13
  $region12: #{mnist_conditional_generator.1} parent=0 // pred_region
    _
  $region13: #{mnist_conditional_generator.1} parent=0 // pred_fallthru
    _
  // Predicated region
  $region14: #{mnist_conditional_generator.1} parent=0 // pred_check
    _
  $region15: #{mnist_conditional_generator.1} parent=0 // pred_check_branch
    %17 = sbr.rel (0) target = $region17
  $region16: #{mnist_conditional_generator.1} parent=0 // pred_region
    _
  $region17: #{mnist_conditional_generator.1} parent=0 // pred_fallthru
    _
  // Predicated region
  $region18: #{mnist_conditional_generator.1} parent=0 // pred_check
    _
  $region19: #{mnist_conditional_generator.1} parent=0 // pred_check_branch
    %19 = sbr.rel (0) target = $region21
  $region20: #{mnist_conditional_generator.1} parent=0 // pred_region
    _
  $region21: #{mnist_conditional_generator.1} parent=0 // pred_fallthru
    _
  %v21 = vld [vmem:[%s0] sm:$0xf]
  %v22 = vld [vmem:[%s1] sm:$0xff]
  %v23 = vld [vmem:[%s1 + $0x8] sm:$0xff]
  %v24 = vld [vmem:[%s1 + $0x10] sm:$0xff]
  %v25 = vld [vmem:[%s1 + $0x18] sm:$0xff]
  %v26 = vld [vmem:[%s1 + $0x20] sm:$0xff]
  %v27 = vld [vmem:[%s1 + $0x28] sm:$0xff]
  %v28 = vld [vmem:[%s1 + $0x30] sm:$0xff]
  %v29 = vld [vmem:[%s1 + $0x38] sm:$0xff]
  %v30 = vld [vmem:[%s1 + $0x40] sm:$0xff]
  %v31 = vld [vmem:[%s1 + $0x48] sm:$0xff]
  %v32 = vld [vmem:[%s1 + $0x50] sm:$0xff]
  %v33 = vld [vmem:[%s1 + $0x58] sm:$0xff]
  %v34 = vld [vmem:[%s1 + $0x60] sm:$0xff]
  %v35 = vld [vmem:[%s1 + $0x68] sm:$0xff]
  %v36 = vld [vmem:[%s1 + $0x70] sm:$0xff]
  %v37 = vld [vmem:[%s1 + $0x78] sm:$0xff]
  %v38 = vld [vmem:[%s2] sm:$0x3]
  %v40 = vlaneseq
  %v41 = vshrl.u32 %v40, 7
  %v42 = vsub.s32 0, %v41
  %v43 = vrot.slane %v38, %v42
  %v44 = vlaneseq
  %v45 = vshrl.u32 %v44, 7
  %v46 = vsub.s32 1, %v45
  %v47 = vrot.slane %v38, %v46
  %v66 = vunpack.c.l.b16 %v22
  %v67 = vunpack.c.h.b16 %v22
  %v68 = vunpack.c.l.b16 %v23
  %v69 = vunpack.c.h.b16 %v23
  %v70 = vunpack.c.l.b16 %v24
  %v71 = vunpack.c.h.b16 %v24
  %v72 = vunpack.c.l.b16 %v25
  %v73 = vunpack.c.h.b16 %v25
  %v74 = vunpack.c.l.b16 %v26
  %v75 = vunpack.c.h.b16 %v26
  %v76 = vunpack.c.l.b16 %v27
  %v77 = vunpack.c.h.b16 %v27
  %v78 = vunpack.c.l.b16 %v28
  %v79 = vunpack.c.h.b16 %v28
  %v80 = vunpack.c.l.b16 %v29
  %v81 = vunpack.c.h.b16 %v29
  %v82 = vunpack.c.l.b16 %v30
  %v83 = vunpack.c.h.b16 %v30
  %v84 = vunpack.c.l.b16 %v31
  %v85 = vunpack.c.h.b16 %v31
  %v86 = vunpack.c.l.b16 %v32
  %v87 = vunpack.c.h.b16 %v32
  %v88 = vunpack.c.l.b16 %v33
  %v89 = vunpack.c.h.b16 %v33
  %v90 = vunpack.c.l.b16 %v34
  %v91 = vunpack.c.h.b16 %v34
  %v92 = vunpack.c.l.b16 %v35
  %v93 = vunpack.c.h.b16 %v35
  %v94 = vunpack.c.l.b16 %v36
  %v95 = vunpack.c.h.b16 %v36
  %v96 = vunpack.c.l.b16 %v37
  %v97 = vunpack.c.h.b16 %v37
  %v98 = vpack.c.b16 %v68, %v66
  %v99 = vpack.c.b16 %v69, %v67
  %v100 = vpack.c.b16 %v72, %v70
  %v101 = vpack.c.b16 %v73, %v71
  %v102 = vpack.c.b16 %v76, %v74
  %v103 = vpack.c.b16 %v77, %v75
  %v104 = vpack.c.b16 %v80, %v78
  %v105 = vpack.c.b16 %v81, %v79
  %v106 = vpack.c.b16 %v84, %v82
  %v107 = vpack.c.b16 %v85, %v83
  %v108 = vpack.c.b16 %v88, %v86
  %v109 = vpack.c.b16 %v89, %v87
  %v110 = vpack.c.b16 %v92, %v90
  %v111 = vpack.c.b16 %v93, %v91
  %v112 = vpack.c.b16 %v96, %v94
  %v113 = vpack.c.b16 %v97, %v95
  %130 = vmatprep.subr.bf16.mxu0 %v99
  %131 = vmatpush1.bf16.msra.mxu0 %v98
  %132 = vmatprep.subr.bf16.mxu0 %v101
  %133 = vmatpush1.bf16.msra.mxu0 %v100
  %134 = vmatprep.subr.bf16.mxu0 %v103
  %135 = vmatpush1.bf16.msra.mxu0 %v102
  %136 = vmatprep.subr.bf16.mxu0 %v105
  %137 = vmatpush1.bf16.msra.mxu0 %v104
  %138 = vmatprep.subr.bf16.mxu0 %v107
  %139 = vmatpush1.bf16.msra.mxu0 %v106
  %140 = vmatprep.subr.bf16.mxu0 %v109
  %141 = vmatpush1.bf16.msra.mxu0 %v108
  %142 = vmatprep.subr.bf16.mxu0 %v111
  %143 = vmatpush1.bf16.msra.mxu0 %v110
  %144 = vmatprep.subr.bf16.mxu0 %v113
  %145 = vmatpush1.bf16.msra.mxu0 %v112
  %146 = vmatprep.subr.bf16.mxu0 0
  %147 = vmatpush1.bf16.msra.mxu0 0
  %148 = vmatprep.subr.bf16.mxu0 0
  %149 = vmatpush1.bf16.msra.mxu0 0
  %150 = vmatprep.subr.bf16.mxu0 0
  %151 = vmatpush1.bf16.msra.mxu0 0
  %152 = vmatprep.subr.bf16.mxu0 0
  %153 = vmatpush1.bf16.msra.mxu0 0
  %154 = vmatprep.subr.bf16.mxu0 0
  %155 = vmatpush1.bf16.msra.mxu0 0
  %156 = vmatprep.subr.bf16.mxu0 0
  %157 = vmatpush1.bf16.msra.mxu0 0
  %158 = vmatprep.subr.bf16.mxu0 0
  %159 = vmatpush1.bf16.msra.mxu0 0
  %160 = vmatprep.subr.bf16.mxu0 0
  %161 = vmatpush1.bf16.msra.mxu0 0
  %162 = vmatprep.mubr.bf16.mxu0 0
  %163 = vmatmul.mubr.bf16.gmra.mrb[0].mxu0 %v21
  %v164 = vpop.f32.mrb[0].mxu0
  %v165 = vadd.f32 %v43, %v164
  %v166 = vpop.f32.mrb[0].mxu0
  %v167 = vadd.f32 %v47, %v166
  %v168 = vpop.f32.mrb[0].mxu0
  %v169 = vpop.f32.mrb[0].mxu0
  %170 = vdwg.mxu0
  %v171 = vmul.f32 %v165, 0.02
  %v172 = vmul.f32 %v167, 0.02
  %v173 = vmax.f32 %v165, %v171
  %v174 = vmax.f32 %v167, %v172
  %v175 = vadd.f32 %v173, %v174
  %176 = vadd.xlane.f32.xlu0 %v175
  %v177 = vpop.xlane.xlu0 %176
  %v178 = vmul.f32 %v177, 0.005
  %v179 = vmul.f32 %v173, %v173
  %v180 = vmul.f32 %v174, %v174
  %v181 = vadd.f32 %v179, %v180
  %182 = vadd.xlane.f32.xlu0 %v181
  %v183 = vpop.xlane.xlu0 %182
  %v184 = vmul.f32 %v183, 0.005
  %v185 = vmul.f32 %v178, %v178
  %v186 = vsub.f32 %v184, %v185
  %v187 = vsub.f32 %v173, %v178
  %v188 = vsub.f32 %v174, %v178
  %v189 = vadd.f32 %v186, 1e-05
  %v190 = vrsqrt.pop %v189
  %v191 = vmul.f32 %v187, %v190
  %v192 = vmul.f32 %v188, %v190
  %v193 = vpack.c.bf16 %v191, %v191
  %v194 = vpack.c.bf16 %v192, %v192
  %v195 = vld [vmem:[%s3] sm:$0xff]
  %v196 = vld [vmem:[%s3 + $0x8] sm:$0xff]
  %v197 = vld [vmem:[%s3 + $0x10] sm:$0xff]
  %v198 = vld [vmem:[%s3 + $0x18] sm:$0xf]
  %v199 = vld [vmem:[%s3 + $0x1c] sm:$0xff]
  %v200 = vld [vmem:[%s3 + $0x24] sm:$0xff]
  %v201 = vld [vmem:[%s3 + $0x2c] sm:$0xff]
  %v202 = vld [vmem:[%s3 + $0x34] sm:$0xf]
  %v203 = vld [vmem:[%s3 + $0x38] sm:$0xff]
  %v204 = vld [vmem:[%s3 + $0x40] sm:$0xff]
  %v205 = vld [vmem:[%s3 + $0x48] sm:$0xff]
  %v206 = vld [vmem:[%s3 + $0x50] sm:$0xf]
  %v207 = vld [vmem:[%s3 + $0x54] sm:$0xff]
  %v208 = vld [vmem:[%s3 + $0x5c] sm:$0xff]
  %v209 = vld [vmem:[%s3 + $0x64] sm:$0xff]
  %v210 = vld [vmem:[%s3 + $0x6c] sm:$0xf]
  %v211 = vld [vmem:[%s3 + $0x70] sm:$0xff]
  %v212 = vld [vmem:[%s3 + $0x78] sm:$0xff]
  %v213 = vld [vmem:[%s3 + $0x80] sm:$0xff]
  %v214 = vld [vmem:[%s3 + $0x88] sm:$0xf]
  %v215 = vld [vmem:[%s3 + $0x8c] sm:$0xff]
  %v216 = vld [vmem:[%s3 + $0x94] sm:$0xff]
  %v217 = vld [vmem:[%s3 + $0x9c] sm:$0xff]
  %v218 = vld [vmem:[%s3 + $0xa4] sm:$0xf]
  %v219 = vld [vmem:[%s3 + $0xa8] sm:$0xff]
  %v220 = vld [vmem:[%s3 + $0xb0] sm:$0xff]
  %v221 = vld [vmem:[%s3 + $0xb8] sm:$0xff]
  %v222 = vld [vmem:[%s3 + $0xc0] sm:$0xf]
  %v223 = vld [vmem:[%s3 + $0xc4] sm:$0xff]
  %v224 = vld [vmem:[%s3 + $0xcc] sm:$0xff]
  %v225 = vld [vmem:[%s3 + $0xd4] sm:$0xff]
  %v226 = vld [vmem:[%s3 + $0xdc] sm:$0xf]
  %v227 = vld [vmem:[%s3 + $0xe0] sm:$0xff]
  %v228 = vld [vmem:[%s3 + $0xe8] sm:$0xff]
  %v229 = vld [vmem:[%s3 + $0xf0] sm:$0xff]
  %v230 = vld [vmem:[%s3 + $0xf8] sm:$0xf]
  %v231 = vld [vmem:[%s3 + $0xfc] sm:$0xff]
  %v232 = vld [vmem:[%s3 + $0x104] sm:$0xff]
  %v233 = vld [vmem:[%s3 + $0x10c] sm:$0xff]
  %v234 = vld [vmem:[%s3 + $0x114] sm:$0xf]
  %v235 = vld [vmem:[%s3 + $0x118] sm:$0xff]
  %v236 = vld [vmem:[%s3 + $0x120] sm:$0xff]
  %v237 = vld [vmem:[%s3 + $0x128] sm:$0xff]
  %v238 = vld [vmem:[%s3 + $0x130] sm:$0xf]
  %v239 = vld [vmem:[%s3 + $0x134] sm:$0xff]
  %v240 = vld [vmem:[%s3 + $0x13c] sm:$0xff]
  %v241 = vld [vmem:[%s3 + $0x144] sm:$0xff]
  %v242 = vld [vmem:[%s3 + $0x14c] sm:$0xf]
  %v243 = vld [vmem:[%s3 + $0x150] sm:$0xff]
  %v244 = vld [vmem:[%s3 + $0x158] sm:$0xff]
  %v245 = vld [vmem:[%s3 + $0x160] sm:$0xff]
  %v246 = vld [vmem:[%s3 + $0x168] sm:$0xf]
  %v247 = vld [vmem:[%s3 + $0x16c] sm:$0xff]
  %v248 = vld [vmem:[%s3 + $0x174] sm:$0xff]
  %v249 = vld [vmem:[%s3 + $0x17c] sm:$0xff]
  %v250 = vld [vmem:[%s3 + $0x184] sm:$0xf]
  %v251 = vld [vmem:[%s3 + $0x188] sm:$0xff]
  %v252 = vld [vmem:[%s3 + $0x190] sm:$0xff]
  %v253 = vld [vmem:[%s3 + $0x198] sm:$0xff]
  %v254 = vld [vmem:[%s3 + $0x1a0] sm:$0xf]
  %v255 = vld [vmem:[%s3 + $0x1a4] sm:$0xff]
  %v256 = vld [vmem:[%s3 + $0x1ac] sm:$0xff]
  %v257 = vld [vmem:[%s3 + $0x1b4] sm:$0xff]
  %v258 = vld [vmem:[%s3 + $0x1bc] sm:$0xf]
  %v259 = vld [vmem:[%s3 + $0x1c0] sm:$0xff]
  %v260 = vld [vmem:[%s3 + $0x1c8] sm:$0xff]
  %v261 = vld [vmem:[%s3 + $0x1d0] sm:$0xff]
  %v262 = vld [vmem:[%s3 + $0x1d8] sm:$0xf]
  %v263 = vld [vmem:[%s3 + $0x1dc] sm:$0xff]
  %v264 = vld [vmem:[%s3 + $0x1e4] sm:$0xff]
  %v265 = vld [vmem:[%s3 + $0x1ec] sm:$0xff]
  %v266 = vld [vmem:[%s3 + $0x1f4] sm:$0xf]
  %v267 = vld [vmem:[%s3 + $0x1f8] sm:$0xff]
  %v268 = vld [vmem:[%s3 + $0x200] sm:$0xff]
  %v269 = vld [vmem:[%s3 + $0x208] sm:$0xff]
  %v270 = vld [vmem:[%s3 + $0x210] sm:$0xf]
  %v271 = vld [vmem:[%s3 + $0x214] sm:$0xff]
  %v272 = vld [vmem:[%s3 + $0x21c] sm:$0xff]
  %v273 = vld [vmem:[%s3 + $0x224] sm:$0xff]
  %v274 = vld [vmem:[%s3 + $0x22c] sm:$0xf]
  %v275 = vld [vmem:[%s3 + $0x230] sm:$0xff]
  %v276 = vld [vmem:[%s3 + $0x238] sm:$0xff]
  %v277 = vld [vmem:[%s3 + $0x240] sm:$0xff]
  %v278 = vld [vmem:[%s3 + $0x248] sm:$0xf]
  %v279 = vld [vmem:[%s3 + $0x24c] sm:$0xff]
  %v280 = vld [vmem:[%s3 + $0x254] sm:$0xff]
  %v281 = vld [vmem:[%s3 + $0x25c] sm:$0xff]
  %v282 = vld [vmem:[%s3 + $0x264] sm:$0xf]
  %v283 = vld [vmem:[%s3 + $0x268] sm:$0xff]
  %v284 = vld [vmem:[%s3 + $0x270] sm:$0xff]
  %v285 = vld [vmem:[%s3 + $0x278] sm:$0xff]
  %v286 = vld [vmem:[%s3 + $0x280] sm:$0xf]
  %v287 = vld [vmem:[%s3 + $0x284] sm:$0xff]
  %v288 = vld [vmem:[%s3 + $0x28c] sm:$0xff]
  %v289 = vld [vmem:[%s3 + $0x294] sm:$0xff]
  %v290 = vld [vmem:[%s3 + $0x29c] sm:$0xf]
  %v291 = vld [vmem:[%s3 + $0x2a0] sm:$0xff]
  %v292 = vld [vmem:[%s3 + $0x2a8] sm:$0xff]
  %v293 = vld [vmem:[%s3 + $0x2b0] sm:$0xff]
  %v294 = vld [vmem:[%s3 + $0x2b8] sm:$0xf]
  %v295 = vld [vmem:[%s3 + $0x2bc] sm:$0xff]
  %v296 = vld [vmem:[%s3 + $0x2c4] sm:$0xff]
  %v297 = vld [vmem:[%s3 + $0x2cc] sm:$0xff]
  %v298 = vld [vmem:[%s3 + $0x2d4] sm:$0xf]
  %v299 = vld [vmem:[%s3 + $0x2d8] sm:$0xff]
  %v300 = vld [vmem:[%s3 + $0x2e0] sm:$0xff]
  %v301 = vld [vmem:[%s3 + $0x2e8] sm:$0xff]
  %v302 = vld [vmem:[%s3 + $0x2f0] sm:$0xf]
  %v303 = vld [vmem:[%s3 + $0x2f4] sm:$0xff]
  %v304 = vld [vmem:[%s3 + $0x2fc] sm:$0xff]
  %v305 = vld [vmem:[%s3 + $0x304] sm:$0xff]
  %v306 = vld [vmem:[%s3 + $0x30c] sm:$0xf]
  %v307 = vld [vmem:[%s3 + $0x310] sm:$0xff]
  %v308 = vld [vmem:[%s3 + $0x318] sm:$0xff]
  %v309 = vld [vmem:[%s3 + $0x320] sm:$0xff]
  %v310 = vld [vmem:[%s3 + $0x328] sm:$0xf]
  %v311 = vld [vmem:[%s3 + $0x32c] sm:$0xff]
  %v312 = vld [vmem:[%s3 + $0x334] sm:$0xff]
  %v313 = vld [vmem:[%s3 + $0x33c] sm:$0xff]
  %v314 = vld [vmem:[%s3 + $0x344] sm:$0xf]
  %v315 = vld [vmem:[%s3 + $0x348] sm:$0xff]
  %v316 = vld [vmem:[%s3 + $0x350] sm:$0xff]
  %v317 = vld [vmem:[%s3 + $0x358] sm:$0xff]
  %v318 = vld [vmem:[%s3 + $0x360] sm:$0xf]
  %v319 = vld [vmem:[%s3 + $0x364] sm:$0xff]
  %v320 = vld [vmem:[%s3 + $0x36c] sm:$0xff]
  %v321 = vld [vmem:[%s3 + $0x374] sm:$0xff]
  %v322 = vld [vmem:[%s3 + $0x37c] sm:$0xf]
  %v323 = vld [vmem:[%s4] sm:$0x7f]
  %v325 = vlaneseq
  %v326 = vshrl.u32 %v325, 7
  %v327 = vsub.s32 0, %v326
  %v328 = vrot.slane %v323, %v327
  %v329 = vlaneseq
  %v330 = vshrl.u32 %v329, 7
  %v331 = vsub.s32 1, %v330
  %v332 = vrot.slane %v323, %v331
  %v333 = vlaneseq
  %v334 = vshrl.u32 %v333, 7
  %v335 = vsub.s32 2, %v334
  %v336 = vrot.slane %v323, %v335
  %v337 = vlaneseq
  %v338 = vshrl.u32 %v337, 7
  %v339 = vsub.s32 3, %v338
  %v340 = vrot.slane %v323, %v339
  %v341 = vlaneseq
  %v342 = vshrl.u32 %v341, 7
  %v343 = vsub.s32 4, %v342
  %v344 = vrot.slane %v323, %v343
  %v345 = vlaneseq
  %v346 = vshrl.u32 %v345, 7
  %v347 = vsub.s32 5, %v346
  %v348 = vrot.slane %v323, %v347
  %v349 = vlaneseq
  %v350 = vshrl.u32 %v349, 7
  %v351 = vsub.s32 6, %v350
  %v352 = vrot.slane %v323, %v351
  %v488 = vunpack.c.l.b16 %v195
  %v489 = vunpack.c.h.b16 %v195
  %v490 = vunpack.c.l.b16 %v196
  %v491 = vunpack.c.h.b16 %v196
  %v492 = vunpack.c.l.b16 %v197
  %v493 = vunpack.c.h.b16 %v197
  %v494 = vunpack.c.l.b16 %v198
  %v495 = vunpack.c.l.b16 %v199
  %v496 = vunpack.c.h.b16 %v199
  %v497 = vunpack.c.l.b16 %v200
  %v498 = vunpack.c.h.b16 %v200
  %v499 = vunpack.c.l.b16 %v201
  %v500 = vunpack.c.h.b16 %v201
  %v501 = vunpack.c.l.b16 %v202
  %v502 = vunpack.c.l.b16 %v203
  %v503 = vunpack.c.h.b16 %v203
  %v504 = vunpack.c.l.b16 %v204
  %v505 = vunpack.c.h.b16 %v204
  %v506 = vunpack.c.l.b16 %v205
  %v507 = vunpack.c.h.b16 %v205
  %v508 = vunpack.c.l.b16 %v206
  %v509 = vunpack.c.l.b16 %v207
  %v510 = vunpack.c.h.b16 %v207
  %v511 = vunpack.c.l.b16 %v208
  %v512 = vunpack.c.h.b16 %v208
  %v513 = vunpack.c.l.b16 %v209
  %v514 = vunpack.c.h.b16 %v209
  %v515 = vunpack.c.l.b16 %v210
  %v516 = vunpack.c.l.b16 %v211
  %v517 = vunpack.c.h.b16 %v211
  %v518 = vunpack.c.l.b16 %v212
  %v519 = vunpack.c.h.b16 %v212
  %v520 = vunpack.c.l.b16 %v213
  %v521 = vunpack.c.h.b16 %v213
  %v522 = vunpack.c.l.b16 %v214
  %v523 = vunpack.c.l.b16 %v215
  %v524 = vunpack.c.h.b16 %v215
  %v525 = vunpack.c.l.b16 %v216
  %v526 = vunpack.c.h.b16 %v216
  %v527 = vunpack.c.l.b16 %v217
  %v528 = vunpack.c.h.b16 %v217
  %v529 = vunpack.c.l.b16 %v218
  %v530 = vunpack.c.l.b16 %v219
  %v531 = vunpack.c.h.b16 %v219
  %v532 = vunpack.c.l.b16 %v220
  %v533 = vunpack.c.h.b16 %v220
  %v534 = vunpack.c.l.b16 %v221
  %v535 = vunpack.c.h.b16 %v221
  %v536 = vunpack.c.l.b16 %v222
  %v537 = vunpack.c.l.b16 %v223
  %v538 = vunpack.c.h.b16 %v223
  %v539 = vunpack.c.l.b16 %v224
  %v540 = vunpack.c.h.b16 %v224
  %v541 = vunpack.c.l.b16 %v225
  %v542 = vunpack.c.h.b16 %v225
  %v543 = vunpack.c.l.b16 %v226
  %v544 = vunpack.c.l.b16 %v227
  %v545 = vunpack.c.h.b16 %v227
  %v546 = vunpack.c.l.b16 %v228
  %v547 = vunpack.c.h.b16 %v228
  %v548 = vunpack.c.l.b16 %v229
  %v549 = vunpack.c.h.b16 %v229
  %v550 = vunpack.c.l.b16 %v230
  %v551 = vunpack.c.l.b16 %v231
  %v552 = vunpack.c.h.b16 %v231
  %v553 = vunpack.c.l.b16 %v232
  %v554 = vunpack.c.h.b16 %v232
  %v555 = vunpack.c.l.b16 %v233
  %v556 = vunpack.c.h.b16 %v233
  %v557 = vunpack.c.l.b16 %v234
  %v558 = vunpack.c.l.b16 %v235
  %v559 = vunpack.c.h.b16 %v235
  %v560 = vunpack.c.l.b16 %v236
  %v561 = vunpack.c.h.b16 %v236
  %v562 = vunpack.c.l.b16 %v237
  %v563 = vunpack.c.h.b16 %v237
  %v564 = vunpack.c.l.b16 %v238
  %v565 = vunpack.c.l.b16 %v239
  %v566 = vunpack.c.h.b16 %v239
  %v567 = vunpack.c.l.b16 %v240
  %v568 = vunpack.c.h.b16 %v240
  %v569 = vunpack.c.l.b16 %v241
  %v570 = vunpack.c.h.b16 %v241
  %v571 = vunpack.c.l.b16 %v242
  %v572 = vunpack.c.l.b16 %v243
  %v573 = vunpack.c.h.b16 %v243
  %v574 = vunpack.c.l.b16 %v244
  %v575 = vunpack.c.h.b16 %v244
  %v576 = vunpack.c.l.b16 %v245
  %v577 = vunpack.c.h.b16 %v245
  %v578 = vunpack.c.l.b16 %v246
  %v579 = vunpack.c.l.b16 %v247
  %v580 = vunpack.c.h.b16 %v247
  %v581 = vunpack.c.l.b16 %v248
  %v582 = vunpack.c.h.b16 %v248
  %v583 = vunpack.c.l.b16 %v249
  %v584 = vunpack.c.h.b16 %v249
  %v585 = vunpack.c.l.b16 %v250
  %v586 = vunpack.c.l.b16 %v251
  %v587 = vunpack.c.h.b16 %v251
  %v588 = vunpack.c.l.b16 %v252
  %v589 = vunpack.c.h.b16 %v252
  %v590 = vunpack.c.l.b16 %v253
  %v591 = vunpack.c.h.b16 %v253
  %v592 = vunpack.c.l.b16 %v254
  %v593 = vunpack.c.l.b16 %v255
  %v594 = vunpack.c.h.b16 %v255
  %v595 = vunpack.c.l.b16 %v256
  %v596 = vunpack.c.h.b16 %v256
  %v597 = vunpack.c.l.b16 %v257
  %v598 = vunpack.c.h.b16 %v257
  %v599 = vunpack.c.l.b16 %v258
  %v600 = vunpack.c.l.b16 %v259
  %v601 = vunpack.c.h.b16 %v259
  %v602 = vunpack.c.l.b16 %v260
  %v603 = vunpack.c.h.b16 %v260
  %v604 = vunpack.c.l.b16 %v261
  %v605 = vunpack.c.h.b16 %v261
  %v606 = vunpack.c.l.b16 %v262
  %v607 = vunpack.c.l.b16 %v263
  %v608 = vunpack.c.h.b16 %v263
  %v609 = vunpack.c.l.b16 %v264
  %v610 = vunpack.c.h.b16 %v264
  %v611 = vunpack.c.l.b16 %v265
  %v612 = vunpack.c.h.b16 %v265
  %v613 = vunpack.c.l.b16 %v266
  %v614 = vunpack.c.l.b16 %v267
  %v615 = vunpack.c.h.b16 %v267
  %v616 = vunpack.c.l.b16 %v268
  %v617 = vunpack.c.h.b16 %v268
  %v618 = vunpack.c.l.b16 %v269
  %v619 = vunpack.c.h.b16 %v269
  %v620 = vunpack.c.l.b16 %v270
  %v621 = vunpack.c.l.b16 %v271
  %v622 = vunpack.c.h.b16 %v271
  %v623 = vunpack.c.l.b16 %v272
  %v624 = vunpack.c.h.b16 %v272
  %v625 = vunpack.c.l.b16 %v273
  %v626 = vunpack.c.h.b16 %v273
  %v627 = vunpack.c.l.b16 %v274
  %v628 = vunpack.c.l.b16 %v275
  %v629 = vunpack.c.h.b16 %v275
  %v630 = vunpack.c.l.b16 %v276
  %v631 = vunpack.c.h.b16 %v276
  %v632 = vunpack.c.l.b16 %v277
  %v633 = vunpack.c.h.b16 %v277
  %v634 = vunpack.c.l.b16 %v278
  %v635 = vunpack.c.l.b16 %v279
  %v636 = vunpack.c.h.b16 %v279
  %v637 = vunpack.c.l.b16 %v280
  %v638 = vunpack.c.h.b16 %v280
  %v639 = vunpack.c.l.b16 %v281
  %v640 = vunpack.c.h.b16 %v281
  %v641 = vunpack.c.l.b16 %v282
  %v642 = vunpack.c.l.b16 %v283
  %v643 = vunpack.c.h.b16 %v283
  %v644 = vunpack.c.l.b16 %v284
  %v645 = vunpack.c.h.b16 %v284
  %v646 = vunpack.c.l.b16 %v285
  %v647 = vunpack.c.h.b16 %v285
  %v648 = vunpack.c.l.b16 %v286
  %v649 = vunpack.c.l.b16 %v287
  %v650 = vunpack.c.h.b16 %v287
  %v651 = vunpack.c.l.b16 %v288
  %v652 = vunpack.c.h.b16 %v288
  %v653 = vunpack.c.l.b16 %v289
  %v654 = vunpack.c.h.b16 %v289
  %v655 = vunpack.c.l.b16 %v290
  %v656 = vunpack.c.l.b16 %v291
  %v657 = vunpack.c.h.b16 %v291
  %v658 = vunpack.c.l.b16 %v292
  %v659 = vunpack.c.h.b16 %v292
  %v660 = vunpack.c.l.b16 %v293
  %v661 = vunpack.c.h.b16 %v293
  %v662 = vunpack.c.l.b16 %v294
  %v663 = vunpack.c.l.b16 %v295
  %v664 = vunpack.c.h.b16 %v295
  %v665 = vunpack.c.l.b16 %v296
  %v666 = vunpack.c.h.b16 %v296
  %v667 = vunpack.c.l.b16 %v297
  %v668 = vunpack.c.h.b16 %v297
  %v669 = vunpack.c.l.b16 %v298
  %v670 = vunpack.c.l.b16 %v299
  %v671 = vunpack.c.h.b16 %v299
  %v672 = vunpack.c.l.b16 %v300
  %v673 = vunpack.c.h.b16 %v300
  %v674 = vunpack.c.l.b16 %v301
  %v675 = vunpack.c.h.b16 %v301
  %v676 = vunpack.c.l.b16 %v302
  %v677 = vunpack.c.l.b16 %v303
  %v678 = vunpack.c.h.b16 %v303
  %v679 = vunpack.c.l.b16 %v304
  %v680 = vunpack.c.h.b16 %v304
  %v681 = vunpack.c.l.b16 %v305
  %v682 = vunpack.c.h.b16 %v305
  %v683 = vunpack.c.l.b16 %v306
  %v684 = vunpack.c.l.b16 %v307
  %v685 = vunpack.c.h.b16 %v307
  %v686 = vunpack.c.l.b16 %v308
  %v687 = vunpack.c.h.b16 %v308
  %v688 = vunpack.c.l.b16 %v309
  %v689 = vunpack.c.h.b16 %v309
  %v690 = vunpack.c.l.b16 %v310
  %v691 = vunpack.c.l.b16 %v311
  %v692 = vunpack.c.h.b16 %v311
  %v693 = vunpack.c.l.b16 %v312
  %v694 = vunpack.c.h.b16 %v312
  %v695 = vunpack.c.l.b16 %v313
  %v696 = vunpack.c.h.b16 %v313
  %v697 = vunpack.c.l.b16 %v314
  %v698 = vunpack.c.l.b16 %v315
  %v699 = vunpack.c.h.b16 %v315
  %v700 = vunpack.c.l.b16 %v316
  %v701 = vunpack.c.h.b16 %v316
  %v702 = vunpack.c.l.b16 %v317
  %v703 = vunpack.c.h.b16 %v317
  %v704 = vunpack.c.l.b16 %v318
  %v705 = vunpack.c.l.b16 %v319
  %v706 = vunpack.c.h.b16 %v319
  %v707 = vunpack.c.l.b16 %v320
  %v708 = vunpack.c.h.b16 %v320
  %v709 = vunpack.c.l.b16 %v321
  %v710 = vunpack.c.h.b16 %v321
  %v711 = vunpack.c.l.b16 %v322
  %v712 = vpack.c.b16 %v495, %v488
  %v713 = vpack.c.b16 %v496, %v489
  %v714 = vpack.c.b16 %v497, %v490
  %v715 = vpack.c.b16 %v498, %v491
  %v716 = vpack.c.b16 %v499, %v492
  %v717 = vpack.c.b16 %v500, %v493
  %v718 = vpack.c.b16 %v501, %v494
  %v719 = vpack.c.b16 %v509, %v502
  %v720 = vpack.c.b16 %v510, %v503
  %v721 = vpack.c.b16 %v511, %v504
  %v722 = vpack.c.b16 %v512, %v505
  %v723 = vpack.c.b16 %v513, %v506
  %v724 = vpack.c.b16 %v514, %v507
  %v725 = vpack.c.b16 %v515, %v508
  %v726 = vpack.c.b16 %v523, %v516
  %v727 = vpack.c.b16 %v524, %v517
  %v728 = vpack.c.b16 %v525, %v518
  %v729 = vpack.c.b16 %v526, %v519
  %v730 = vpack.c.b16 %v527, %v520
  %v731 = vpack.c.b16 %v528, %v521
  %v732 = vpack.c.b16 %v529, %v522
  %v733 = vpack.c.b16 %v537, %v530
  %v734 = vpack.c.b16 %v538, %v531
  %v735 = vpack.c.b16 %v539, %v532
  %v736 = vpack.c.b16 %v540, %v533
  %v737 = vpack.c.b16 %v541, %v534
  %v738 = vpack.c.b16 %v542, %v535
  %v739 = vpack.c.b16 %v543, %v536
  %v740 = vpack.c.b16 %v551, %v544
  %v741 = vpack.c.b16 %v552, %v545
  %v742 = vpack.c.b16 %v553, %v546
  %v743 = vpack.c.b16 %v554, %v547
  %v744 = vpack.c.b16 %v555, %v548
  %v745 = vpack.c.b16 %v556, %v549
  %v746 = vpack.c.b16 %v557, %v550
  %v747 = vpack.c.b16 %v565, %v558
  %v748 = vpack.c.b16 %v566, %v559
  %v749 = vpack.c.b16 %v567, %v560
  %v750 = vpack.c.b16 %v568, %v561
  %v751 = vpack.c.b16 %v569, %v562
  %v752 = vpack.c.b16 %v570, %v563
  %v753 = vpack.c.b16 %v571, %v564
  %v754 = vpack.c.b16 %v579, %v572
  %v755 = vpack.c.b16 %v580, %v573
  %v756 = vpack.c.b16 %v581, %v574
  %v757 = vpack.c.b16 %v582, %v575
  %v758 = vpack.c.b16 %v583, %v576
  %v759 = vpack.c.b16 %v584, %v577
  %v760 = vpack.c.b16 %v585, %v578
  %v761 = vpack.c.b16 %v593, %v586
  %v762 = vpack.c.b16 %v594, %v587
  %v763 = vpack.c.b16 %v595, %v588
  %v764 = vpack.c.b16 %v596, %v589
  %v765 = vpack.c.b16 %v597, %v590
  %v766 = vpack.c.b16 %v598, %v591
  %v767 = vpack.c.b16 %v599, %v592
  %v768 = vpack.c.b16 %v607, %v600
  %v769 = vpack.c.b16 %v608, %v601
  %v770 = vpack.c.b16 %v609, %v602
  %v771 = vpack.c.b16 %v610, %v603
  %v772 = vpack.c.b16 %v611, %v604
  %v773 = vpack.c.b16 %v612, %v605
  %v774 = vpack.c.b16 %v613, %v606
  %v775 = vpack.c.b16 %v621, %v614
  %v776 = vpack.c.b16 %v622, %v615
  %v777 = vpack.c.b16 %v623, %v616
  %v778 = vpack.c.b16 %v624, %v617
  %v779 = vpack.c.b16 %v625, %v618
  %v780 = vpack.c.b16 %v626, %v619
  %v781 = vpack.c.b16 %v627, %v620
  %v782 = vpack.c.b16 %v635, %v628
  %v783 = vpack.c.b16 %v636, %v629
  %v784 = vpack.c.b16 %v637, %v630
  %v785 = vpack.c.b16 %v638, %v631
  %v786 = vpack.c.b16 %v639, %v632
  %v787 = vpack.c.b16 %v640, %v633
  %v788 = vpack.c.b16 %v641, %v634
  %v789 = vpack.c.b16 %v649, %v642
  %v790 = vpack.c.b16 %v650, %v643
  %v791 = vpack.c.b16 %v651, %v644
  %v792 = vpack.c.b16 %v652, %v645
  %v793 = vpack.c.b16 %v653, %v646
  %v794 = vpack.c.b16 %v654, %v647
  %v795 = vpack.c.b16 %v655, %v648
  %v796 = vpack.c.b16 %v663, %v656
  %v797 = vpack.c.b16 %v664, %v657
  %v798 = vpack.c.b16 %v665, %v658
  %v799 = vpack.c.b16 %v666, %v659
  %v800 = vpack.c.b16 %v667, %v660
  %v801 = vpack.c.b16 %v668, %v661
  %v802 = vpack.c.b16 %v669, %v662
  %v803 = vpack.c.b16 %v677, %v670
  %v804 = vpack.c.b16 %v678, %v671
  %v805 = vpack.c.b16 %v679, %v672
  %v806 = vpack.c.b16 %v680, %v673
  %v807 = vpack.c.b16 %v681, %v674
  %v808 = vpack.c.b16 %v682, %v675
  %v809 = vpack.c.b16 %v683, %v676
  %v810 = vpack.c.b16 %v691, %v684
  %v811 = vpack.c.b16 %v692, %v685
  %v812 = vpack.c.b16 %v693, %v686
  %v813 = vpack.c.b16 %v694, %v687
  %v814 = vpack.c.b16 %v695, %v688
  %v815 = vpack.c.b16 %v696, %v689
  %v816 = vpack.c.b16 %v697, %v690
  %v817 = vpack.c.b16 %v705, %v698
  %v818 = vpack.c.b16 %v706, %v699
  %v819 = vpack.c.b16 %v707, %v700
  %v820 = vpack.c.b16 %v708, %v701
  %v821 = vpack.c.b16 %v709, %v702
  %v822 = vpack.c.b16 %v710, %v703
  %v823 = vpack.c.b16 %v711, %v704
  %936 = vmatprep.subr.bf16.mxu0 %v713
  %937 = vmatpush1.bf16.msra.mxu0 %v712
  %938 = vmatprep.subr.bf16.mxu0 %v720
  %939 = vmatpush1.bf16.msra.mxu0 %v719
  %940 = vmatprep.subr.bf16.mxu0 %v727
  %941 = vmatpush1.bf16.msra.mxu0 %v726
  %942 = vmatprep.subr.bf16.mxu0 %v734
  %943 = vmatpush1.bf16.msra.mxu0 %v733
  %944 = vmatprep.subr.bf16.mxu0 %v741
  %945 = vmatpush1.bf16.msra.mxu0 %v740
  %946 = vmatprep.subr.bf16.mxu0 %v748
  %947 = vmatpush1.bf16.msra.mxu0 %v747
  %948 = vmatprep.subr.bf16.mxu0 %v755
  %949 = vmatpush1.bf16.msra.mxu0 %v754
  %950 = vmatprep.subr.bf16.mxu0 %v762
  %951 = vmatpush1.bf16.msra.mxu0 %v761
  %952 = vmatprep.subr.bf16.mxu0 %v769
  %953 = vmatpush1.bf16.msra.mxu0 %v768
  %954 = vmatprep.subr.bf16.mxu0 %v776
  %955 = vmatpush1.bf16.msra.mxu0 %v775
  %956 = vmatprep.subr.bf16.mxu0 %v783
  %957 = vmatpush1.bf16.msra.mxu0 %v782
  %958 = vmatprep.subr.bf16.mxu0 %v790
  %959 = vmatpush1.bf16.msra.mxu0 %v789
  %960 = vmatprep.subr.bf16.mxu0 %v797
  %961 = vmatpush1.bf16.msra.mxu0 %v796
  %962 = vmatprep.subr.bf16.mxu0 %v804
  %963 = vmatpush1.bf16.msra.mxu0 %v803
  %964 = vmatprep.subr.bf16.mxu0 %v811
  %965 = vmatpush1.bf16.msra.mxu0 %v810
  %966 = vmatprep.subr.bf16.mxu0 %v818
  %967 = vmatpush1.bf16.msra.mxu0 %v817
  %968 = vmatprep.mubr.bf16.mxu0 %v194
  %969 = vmatmul.mubr.bf16.gmra.mrb[0].mxu0 %v193
  %v970 = vpop.f32.mrb[0].mxu0
  %v971 = vadd.f32 %v328, %v970
  %v972 = vpop.f32.mrb[0].mxu0
  %v973 = vadd.f32 %v332, %v972
  %v974 = vpop.f32.mrb[0].mxu0
  %v975 = vpop.f32.mrb[0].mxu0
  %976 = vdwg.mxu0
  %977 = vmatprep.subr.bf16.mxu0 %v715
  %978 = vmatpush1.bf16.msra.mxu0 %v714
  %979 = vmatprep.subr.bf16.mxu0 %v722
  %980 = vmatpush1.bf16.msra.mxu0 %v721
  %981 = vmatprep.subr.bf16.mxu0 %v729
  %982 = vmatpush1.bf16.msra.mxu0 %v728
  %983 = vmatprep.subr.bf16.mxu0 %v736
  %984 = vmatpush1.bf16.msra.mxu0 %v735
  %985 = vmatprep.subr.bf16.mxu0 %v743
  %986 = vmatpush1.bf16.msra.mxu0 %v742
  %987 = vmatprep.subr.bf16.mxu0 %v750
  %988 = vmatpush1.bf16.msra.mxu0 %v749
  %989 = vmatprep.subr.bf16.mxu0 %v757
  %990 = vmatpush1.bf16.msra.mxu0 %v756
  %991 = vmatprep.subr.bf16.mxu0 %v764
  %992 = vmatpush1.bf16.msra.mxu0 %v763
  %993 = vmatprep.subr.bf16.mxu0 %v771
  %994 = vmatpush1.bf16.msra.mxu0 %v770
  %995 = vmatprep.subr.bf16.mxu0 %v778
  %996 = vmatpush1.bf16.msra.mxu0 %v777
  %997 = vmatprep.subr.bf16.mxu0 %v785
  %998 = vmatpush1.bf16.msra.mxu0 %v784
  %999 = vmatprep.subr.bf16.mxu0 %v792
  %1000 = vmatpush1.bf16.msra.mxu0 %v791
  %1001 = vmatprep.subr.bf16.mxu0 %v799
  %1002 = vmatpush1.bf16.msra.mxu0 %v798
  %1003 = vmatprep.subr.bf16.mxu0 %v806
  %1004 = vmatpush1.bf16.msra.mxu0 %v805
  %1005 = vmatprep.subr.bf16.mxu0 %v813
  %1006 = vmatpush1.bf16.msra.mxu0 %v812
  %1007 = vmatprep.subr.bf16.mxu0 %v820
  %1008 = vmatpush1.bf16.msra.mxu0 %v819
  %1009 = vmatprep.mubr.bf16.mxu0 %v194
  %1010 = vmatmul.mubr.bf16.gmra.mrb[0].mxu0 %v193
  %v1011 = vpop.f32.mrb[0].mxu0
  %v1012 = vadd.f32 %v336, %v1011
  %v1013 = vpop.f32.mrb[0].mxu0
  %v1014 = vadd.f32 %v340, %v1013
  %v1015 = vpop.f32.mrb[0].mxu0
  %v1016 = vpop.f32.mrb[0].mxu0
  %1017 = vdwg.mxu0
  %1018 = vmatprep.subr.bf16.mxu0 %v717
  %1019 = vmatpush1.bf16.msra.mxu0 %v716
  %1020 = vmatprep.subr.bf16.mxu0 %v724
  %1021 = vmatpush1.bf16.msra.mxu0 %v723
  %1022 = vmatprep.subr.bf16.mxu0 %v731
  %1023 = vmatpush1.bf16.msra.mxu0 %v730
  %1024 = vmatprep.subr.bf16.mxu0 %v738
  %1025 = vmatpush1.bf16.msra.mxu0 %v737
  %1026 = vmatprep.subr.bf16.mxu0 %v745
  %1027 = vmatpush1.bf16.msra.mxu0 %v744
  %1028 = vmatprep.subr.bf16.mxu0 %v752
  %1029 = vmatpush1.bf16.msra.mxu0 %v751
  %1030 = vmatprep.subr.bf16.mxu0 %v759
  %1031 = vmatpush1.bf16.msra.mxu0 %v758
  %1032 = vmatprep.subr.bf16.mxu0 %v766
  %1033 = vmatpush1.bf16.msra.mxu0 %v765
  %1034 = vmatprep.subr.bf16.mxu0 %v773
  %1035 = vmatpush1.bf16.msra.mxu0 %v772
  %1036 = vmatprep.subr.bf16.mxu0 %v780
  %1037 = vmatpush1.bf16.msra.mxu0 %v779
  %1038 = vmatprep.subr.bf16.mxu0 %v787
  %1039 = vmatpush1.bf16.msra.mxu0 %v786
  %1040 = vmatprep.subr.bf16.mxu0 %v794
  %1041 = vmatpush1.bf16.msra.mxu0 %v793
  %1042 = vmatprep.subr.bf16.mxu0 %v801
  %1043 = vmatpush1.bf16.msra.mxu0 %v800
  %1044 = vmatprep.subr.bf16.mxu0 %v808
  %1045 = vmatpush1.bf16.msra.mxu0 %v807
  %1046 = vmatprep.subr.bf16.mxu0 %v815
  %1047 = vmatpush1.bf16.msra.mxu0 %v814
  %1048 = vmatprep.subr.bf16.mxu0 %v822
  %1049 = vmatpush1.bf16.msra.mxu0 %v821
  %1050 = vmatprep.mubr.bf16.mxu0 %v194
  %1051 = vmatmul.mubr.bf16.gmra.mrb[0].mxu0 %v193
  %v1052 = vpop.f32.mrb[0].mxu0
  %v1053 = vadd.f32 %v344, %v1052
  %v1054 = vpop.f32.mrb[0].mxu0
  %v1055 = vadd.f32 %v348, %v1054
  %v1056 = vpop.f32.mrb[0].mxu0
  %v1057 = vpop.f32.mrb[0].mxu0
  %1058 = vdwg.mxu0
  %1059 = vmatprep.subr.bf16.mxu0 0
  %1060 = vmatpush1.bf16.msra.mxu0 %v718
  %1061 = vmatprep.subr.bf16.mxu0 0
  %1062 = vmatpush1.bf16.msra.mxu0 %v725
  %1063 = vmatprep.subr.bf16.mxu0 0
  %1064 = vmatpush1.bf16.msra.mxu0 %v732
  %1065 = vmatprep.subr.bf16.mxu0 0
  %1066 = vmatpush1.bf16.msra.mxu0 %v739
  %1067 = vmatprep.subr.bf16.mxu0 0
  %1068 = vmatpush1.bf16.msra.mxu0 %v746
  %1069 = vmatprep.subr.bf16.mxu0 0
  %1070 = vmatpush1.bf16.msra.mxu0 %v753
  %1071 = vmatprep.subr.bf16.mxu0 0
  %1072 = vmatpush1.bf16.msra.mxu0 %v760
  %1073 = vmatprep.subr.bf16.mxu0 0
  %1074 = vmatpush1.bf16.msra.mxu0 %v767
  %1075 = vmatprep.subr.bf16.mxu0 0
  %1076 = vmatpush1.bf16.msra.mxu0 %v774
  %1077 = vmatprep.subr.bf16.mxu0 0
  %1078 = vmatpush1.bf16.msra.mxu0 %v781
  %1079 = vmatprep.subr.bf16.mxu0 0
  %1080 = vmatpush1.bf16.msra.mxu0 %v788
  %1081 = vmatprep.subr.bf16.mxu0 0
  %1082 = vmatpush1.bf16.msra.mxu0 %v795
  %1083 = vmatprep.subr.bf16.mxu0 0
  %1084 = vmatpush1.bf16.msra.mxu0 %v802
  %1085 = vmatprep.subr.bf16.mxu0 0
  %1086 = vmatpush1.bf16.msra.mxu0 %v809
  %1087 = vmatprep.subr.bf16.mxu0 0
  %1088 = vmatpush1.bf16.msra.mxu0 %v816
  %1089 = vmatprep.subr.bf16.mxu0 0
  %1090 = vmatpush1.bf16.msra.mxu0 %v823
  %1091 = vmatprep.mubr.bf16.mxu0 %v194
  %1092 = vmatmul.mubr.bf16.gmra.mrb[0].mxu0 %v193
  %v1093 = vpop.f32.mrb[0].mxu0
  %v1094 = vadd.f32 %v352, %v1093
  %v1095 = vpop.f32.mrb[0].mxu0
  %v1096 = vpop.f32.mrb[0].mxu0
  %v1097 = vpop.f32.mrb[0].mxu0
  %1098 = vdwg.mxu0
  %v1099 = vmul.f32 %v971, 0.5
  %v1100 = vmul.f32 %v973, 0.5
  %v1101 = vmul.f32 %v1012, 0.5
  %v1102 = vmul.f32 %v1014, 0.5
  %v1103 = vmul.f32 %v1053, 0.5
  %v1104 = vmul.f32 %v1055, 0.5
  %v1105 = vmul.f32 %v1094, 0.5
  %v1106 = vtanh.pop %v1099
  %v1107 = vtanh.pop %v1100
  %v1108 = vtanh.pop %v1101
  %v1109 = vtanh.pop %v1102
  %v1110 = vtanh.pop %v1103
  %v1111 = vtanh.pop %v1104
  %v1112 = vtanh.pop %v1105
  %v1113 = vmul.f32 %v1106, 0.5
  %v1114 = vmul.f32 %v1107, 0.5
  %v1115 = vmul.f32 %v1108, 0.5
  %v1116 = vmul.f32 %v1109, 0.5
  %v1117 = vmul.f32 %v1110, 0.5
  %v1118 = vmul.f32 %v1111, 0.5
  %v1119 = vmul.f32 %v1112, 0.5
  %v1120 = vadd.f32 %v1113, 0.5
  %v1121 = vadd.f32 %v1114, 0.5
  %v1122 = vadd.f32 %v1115, 0.5
  %v1123 = vadd.f32 %v1116, 0.5
  %v1124 = vadd.f32 %v1117, 0.5
  %v1125 = vadd.f32 %v1118, 0.5
  %v1126 = vadd.f32 %v1119, 0.5
  %1127 = vst [vmem:[%s5] sm:$0xff] %v1120
  %1128 = vst [vmem:[%s5 + $0x8] sm:$0xff] %v1121
  %1129 = vst [vmem:[%s5 + $0x10] sm:$0xff] %v1122
  %1130 = vst [vmem:[%s5 + $0x18] sm:$0xff] %v1123
  %1131 = vst [vmem:[%s5 + $0x20] sm:$0xff] %v1124
  %1132 = vst [vmem:[%s5 + $0x28] sm:$0xff] %v1125
  %vm1133 = vcmask 130048
  %1134 = vst.msk [vmem:[%s5 + $0x30] sm:$0xff] %vm1133, %v1126
  // Predicated region
  $region22: #{mnist_conditional_generator.1} parent=0 // pred_check
    _
  $region23: #{mnist_conditional_generator.1} parent=0 // pred_check_branch
    %1136 = sbr.rel (0) target = $region25
  $region24: #{mnist_conditional_generator.1} parent=0 // pred_region
    _
  $region25: #{mnist_conditional_generator.1} parent=0 // pred_fallthru
    _
  // Predicated region
  $region26: #{mnist_conditional_generator.1} parent=0 // pred_check
    _
  $region27: #{mnist_conditional_generator.1} parent=0 // pred_check_branch
    %1138 = sbr.rel (0) target = $region29
  $region28: #{mnist_conditional_generator.1} parent=0 // pred_region
    _
  $region29: #{mnist_conditional_generator.1} parent=0 // pred_fallthru
    _

</llo_original>
